<compile_context>
chip_gen: v7x
topology: tpu7x:2x2x1
jax: 0.10.0
libtpu: 0.0.40
codegen_flags: <defaults>
</compile_context>

<pallas_src>
import functools
import math

import jax
import jax.numpy as jnp
from jax.experimental import pallas as pl
from jax.experimental.pallas import tpu as pltpu


def _round_up(n, m):
    return ((n + m - 1) // m) * m


def projection_head_kernel(x_ref, w1_ref, b1_ref, w2_ref, b2_ref, o_ref, *,
                           compute_dtype):
    # Fused Linear -> ReLU -> Linear on one batch tile, all in VMEM.
    # MXU-input casts happen here (VPU slot, hidden under the MXU);
    # accumulation, bias add and ReLU stay in float32.
    cdt = compute_dtype
    x = x_ref[...].astype(cdt)
    h = jnp.dot(x, w1_ref[...].astype(cdt), preferred_element_type=jnp.float32)
    h = jnp.maximum(h + b1_ref[...].astype(jnp.float32), 0.0)           # ReLU
    out = jnp.dot(h.astype(cdt), w2_ref[...].astype(cdt),
                  preferred_element_type=jnp.float32)
    out = out + b2_ref[...].astype(jnp.float32)
    o_ref[...] = out.astype(o_ref.dtype)


def _choose_tile_b(B, tile_b, *, align=16, cap=2048):
    """Pick the batch tile: big (amortize per-step overhead), >=2 grid steps when
    possible (v7x megacore), capped so tiles fit every generation's scoped VMEM."""
    if B <= align:
        return B  # single full-extent block (full-dim block shapes are always legal)
    if tile_b is None:
        tb = min(cap, _round_up(pl.cdiv(B, 2), align))
    else:
        tb = max(align, (int(tile_b) // align) * align)
    return min(tb, _round_up(B, align))


def projection_head(x, w1, b1, w2, b2, *, tile_b=None,
                    compute_dtype=jnp.bfloat16, out_dtype=None):
    """relu(x @ w1 + b1) @ w2 + b2 with a batch-tiled fused Pallas kernel.

    x  : (B, in_dim)      -- NOT cast in the wrapper; cast in-kernel to compute_dtype.
    w1 : (in_dim, hidden)   w2 : (hidden, out_dim)   (transposed vs. torch weights)
    b1 : (1, hidden)        b2 : (1, out_dim)        (kept in their own dtype, f32 rec.)
    compute_dtype: MXU-input dtype (default bf16); accumulation stays f32.
    out_dtype: output dtype (default: x.dtype).  Pass bf16 to cut output HBM traffic.
    """
    B, in_dim = x.shape
    hidden = w1.shape[1]
    out_dim = w2.shape[1]
    out_dtype = jnp.dtype(out_dtype) if out_dtype is not None else jnp.dtype(x.dtype)
    cdt = jnp.dtype(compute_dtype)

    tb = _choose_tile_b(B, tile_b)
    grid = (pl.cdiv(B, tb),)   # non-divisible grid: boundary output block is masked

    itemsize = lambda a: jnp.dtype(a.dtype).itemsize
    flops = 2 * B * (in_dim * hidden + hidden * out_dim)
    bytes_accessed = (
        B * in_dim * itemsize(x)                      # x read
        + B * out_dim * out_dtype.itemsize            # out write
        + (w1.size + b1.size) * itemsize(w1)          # resident params (read once)
        + (w2.size + b2.size) * itemsize(w2)
    )
    cost = pl.CostEstimate(flops=int(flops), transcendentals=0,
                           bytes_accessed=int(bytes_accessed))

    kernel = functools.partial(projection_head_kernel, compute_dtype=cdt)

    return pl.pallas_call(
        kernel,
        out_shape=jax.ShapeDtypeStruct((B, out_dim), out_dtype),
        grid_spec=pltpu.PrefetchScalarGridSpec(
            num_scalar_prefetch=0,
            grid=grid,
            in_specs=[
                pl.BlockSpec((tb, in_dim), lambda i: (i, 0)),        # x tile (streams)
                pl.BlockSpec((in_dim, hidden), lambda i: (0, 0)),    # W1 (VMEM-resident)
                pl.BlockSpec((1, hidden), lambda i: (0, 0)),         # b1
                pl.BlockSpec((hidden, out_dim), lambda i: (0, 0)),   # W2 (VMEM-resident)
                pl.BlockSpec((1, out_dim), lambda i: (0, 0)),        # b2
            ],
            out_specs=pl.BlockSpec((tb, out_dim), lambda i: (i, 0)),
        ),
        compiler_params=pltpu.CompilerParams(
            dimension_semantics=("parallel",),       # shards batch across TCs on v7x
            vmem_limit_bytes=32 * 1024 * 1024,       # safe headroom on v5e/v6e/v7x
        ),
        cost_estimate=cost,
    )(x, w1, b1, w2, b2)


def init_params(key, in_dim=128, hidden=512, out_dim=128, dtype=jnp.float32):
    # Mimics torch.nn.Linear default init: U(-1/sqrt(fan_in), 1/sqrt(fan_in)).
    k1, k2, k3, k4 = jax.random.split(key, 4)
    bound1 = 1.0 / math.sqrt(in_dim)
    bound2 = 1.0 / math.sqrt(hidden)
    w1 = jax.random.uniform(k1, (in_dim, hidden), dtype, -bound1, bound1)
    b1 = jax.random.uniform(k2, (1, hidden), dtype, -bound1, bound1)
    w2 = jax.random.uniform(k3, (hidden, out_dim), dtype, -bound2, bound2)
    b2 = jax.random.uniform(k4, (1, out_dim), dtype, -bound2, bound2)
    return w1, b1, w2, b2


if __name__ == "__main__":
    key = jax.random.PRNGKey(0)
    kx, kp = jax.random.split(key)

    # Module-consistent shapes.  B deliberately not a multiple of the tile so the
    # masked non-divisible-grid boundary path (and a 2-step grid) is exercised.
    B, in_dim, hidden, out_dim = 37, 128, 512, 128
    x = jax.random.normal(kx, (B, in_dim), jnp.float32)
    w1, b1, w2, b2 = init_params(kp, in_dim, hidden, out_dim)

    ref = jnp.maximum(x @ w1 + b1, 0.0) @ w2 + b2

    # f32 compute path (tight tolerance).
    out_f32 = jax.block_until_ready(
        projection_head(x, w1, b1, w2, b2, compute_dtype=jnp.float32))
    assert out_f32.shape == (B, out_dim)
    assert jnp.allclose(out_f32, ref, atol=1e-4, rtol=1e-4)

    # bf16 fast path (default): weights stored in bf16 ONCE outside the hot path,
    # biases stay f32, x stays f32 in HBM and is cast in-kernel, f32 accumulation.
    w1_bf16 = w1.astype(jnp.bfloat16)
    w2_bf16 = w2.astype(jnp.bfloat16)
    out_bf16 = jax.block_until_ready(
        projection_head(x, w1_bf16, b1, w2_bf16, b2))
    assert out_bf16.shape == (B, out_dim)
    assert out_bf16.dtype == jnp.float32
    assert jnp.allclose(out_bf16, ref, atol=5e-2, rtol=5e-2)

    print("KERNEL_OK")
</pallas_src>

<mosaic_0001>
module attributes {stable_mosaic.version = 11 : i64} {
  func.func @projection_head_kernel(%arg0: i32, %arg1: memref<32x128xf32, #tpu.memory_space<vmem>>, %arg2: memref<128x512xf32, #tpu.memory_space<vmem>>, %arg3: memref<1x512xf32, #tpu.memory_space<vmem>>, %arg4: memref<512x128xf32, #tpu.memory_space<vmem>>, %arg5: memref<1x128xf32, #tpu.memory_space<vmem>>, %arg6: memref<32x128xf32, #tpu.memory_space<vmem>>) attributes {dimension_semantics = [#tpu.dimension_semantics<parallel>], iteration_bounds = array<i64: 2>, scalar_prefetch = 0 : i64, scratch_operands = 0 : i64, tpu.core_type = #tpu.core_type<tc>, window_params = [{transform_indices = @transform_0, window_bounds = array<i64: 32, 128>}, {pipeline_mode = #tpu.pipeline_mode<synchronous>, transform_indices = @transform_1, window_bounds = array<i64: 128, 512>}, {pipeline_mode = #tpu.pipeline_mode<synchronous>, transform_indices = @transform_2, window_bounds = array<i64: 1, 512>}, {pipeline_mode = #tpu.pipeline_mode<synchronous>, transform_indices = @transform_3, window_bounds = array<i64: 512, 128>}, {pipeline_mode = #tpu.pipeline_mode<synchronous>, transform_indices = @transform_4, window_bounds = array<i64: 1, 128>}, {transform_indices = @transform_5, window_bounds = array<i64: 32, 128>}]} {
    %c0 = arith.constant 0 : index
    %c0_0 = arith.constant 0 : index
    %0 = vector.load %arg1[%c0, %c0_0] : memref<32x128xf32, #tpu.memory_space<vmem>>, vector<32x128xf32>
    %c0_1 = arith.constant 0 : index
    %c0_2 = arith.constant 0 : index
    %1 = vector.load %arg2[%c0_1, %c0_2] : memref<128x512xf32, #tpu.memory_space<vmem>>, vector<128x512xf32>
    %cst = arith.constant dense<0.000000e+00> : vector<32x512xf32>
    %2 = tpu.matmul %0, %1, %cst {dimension_numbers = #tpu.dot_dimension_numbers<[1], [0], [0], [1], [0, 0, 1, 1], [], []>} : vector<32x128xf32>, vector<128x512xf32>, vector<32x512xf32> -> vector<32x512xf32>
    %c0_3 = arith.constant 0 : index
    %c0_4 = arith.constant 0 : index
    %3 = vector.load %arg3[%c0_3, %c0_4] : memref<1x512xf32, #tpu.memory_space<vmem>>, vector<1x512xf32>
    %4 = vector.broadcast %3 : vector<1x512xf32> to vector<32x512xf32>
    %5 = arith.addf %2, %4 : vector<32x512xf32>
    %cst_5 = arith.constant 0.000000e+00 : f32
    %6 = vector.broadcast %cst_5 : f32 to vector<32x512xf32>
    %7 = arith.maximumf %5, %6 : vector<32x512xf32>
    %c0_6 = arith.constant 0 : index
    %c0_7 = arith.constant 0 : index
    %8 = vector.load %arg4[%c0_6, %c0_7] : memref<512x128xf32, #tpu.memory_space<vmem>>, vector<512x128xf32>
    %cst_8 = arith.constant dense<0.000000e+00> : vector<32x128xf32>
    %9 = tpu.matmul %7, %8, %cst_8 {dimension_numbers = #tpu.dot_dimension_numbers<[1], [0], [0], [1], [0, 0, 1, 1], [], []>} : vector<32x512xf32>, vector<512x128xf32>, vector<32x128xf32> -> vector<32x128xf32>
    %c0_9 = arith.constant 0 : index
    %c0_10 = arith.constant 0 : index
    %10 = vector.load %arg5[%c0_9, %c0_10] : memref<1x128xf32, #tpu.memory_space<vmem>>, vector<1x128xf32>
    %11 = vector.broadcast %10 : vector<1x128xf32> to vector<32x128xf32>
    %12 = arith.addf %9, %11 : vector<32x128xf32>
    %c0_11 = arith.constant 0 : index
    %c0_12 = arith.constant 0 : index
    %13 = vector.load %arg6[%c0_11, %c0_12] : memref<32x128xf32, #tpu.memory_space<vmem>>, vector<32x128xf32>
    tpu.vector_store %arg6[%c0_11, %c0_12], %12 {strides = array<i32>} : memref<32x128xf32, #tpu.memory_space<vmem>>, vector<32x128xf32>,
    return
  }
  func.func @transform_0(%arg0: i32) -> (i32, i32) {
    %c0_i32 = arith.constant 0 : i32
    %c0_i32_0 = arith.constant 0 : i32
    return %arg0, %c0_i32 : i32, i32
  }
  func.func @transform_1(%arg0: i32) -> (i32, i32) {
    %c0_i32 = arith.constant 0 : i32
    %c0_i32_0 = arith.constant 0 : i32
    %c0_i32_1 = arith.constant 0 : i32
    return %c0_i32, %c0_i32_0 : i32, i32
  }
  func.func @transform_2(%arg0: i32) -> (i32, i32) {
    %c0_i32 = arith.constant 0 : i32
    %c0_i32_0 = arith.constant 0 : i32
    %c0_i32_1 = arith.constant 0 : i32
    return %c0_i32, %c0_i32_0 : i32, i32
  }
  func.func @transform_3(%arg0: i32) -> (i32, i32) {
    %c0_i32 = arith.constant 0 : i32
    %c0_i32_0 = arith.constant 0 : i32
    %c0_i32_1 = arith.constant 0 : i32
    return %c0_i32, %c0_i32_0 : i32, i32
  }
  func.func @transform_4(%arg0: i32) -> (i32, i32) {
    %c0_i32 = arith.constant 0 : i32
    %c0_i32_0 = arith.constant 0 : i32
    %c0_i32_1 = arith.constant 0 : i32
    return %c0_i32, %c0_i32_0 : i32, i32
  }
  func.func @transform_5(%arg0: i32) -> (i32, i32) {
    %c0_i32 = arith.constant 0 : i32
    %c0_i32_0 = arith.constant 0 : i32
    return %arg0, %c0_i32 : i32, i32
  }
}

</mosaic_0001>

<llo_original>
// kernel: tpu_custom_call.1
$region0: #{tpu_custom_call.1}
  #allocation0 [shape = 'u32[]', space=smem, size = 0x4, offset = 0x4, fixed_abs, tag = 'smem constant byte address 0x4 - core index']
  #allocation1 [shape = 'u32[144,128]{1,0:T(1,128)}', space=vmem, size = 0x12000, scoped, tag = 'internal scratch']
  %s0 = inlined_call_operand.hbm [shape: f32[37,128], index: 0, kind: input, shape index: {}]
  %s1 = inlined_call_operand.hbm [shape: f32[128,512], index: 1, kind: input, shape index: {}]
  %s2 = inlined_call_operand.vmem [shape: f32[1,512], index: 2, kind: input, shape index: {}]
  %s3 = inlined_call_operand.hbm [shape: f32[512,128], index: 3, kind: input, shape index: {}]
  %s4 = inlined_call_operand.vmem [shape: f32[1,128], index: 4, kind: input, shape index: {}]
  %s5 = inlined_call_operand.hbm [shape: f32[37,128], index: 5, kind: output, shape index: {}]
  %s6 = sld [smem:[#allocation0]]
  $region65: #{tpu_custom_call.1} parent=0
    _
  %s8 = ssub.s32 1, %s6
  %s9 = scalar_select 0, %s8, %s6
  $region1: #{tpu_custom_call.1} parent=0
    #allocation2 [shape = 'u8[32768]{0}', space=vmem, size = 0x8000, scoped, tag = 'input window, operand 0']
    #allocation3 [shape = 's32[2]{0}', space=sflag, size = 0x8, scoped, tag = 'scoped memory for tpu_custom_call.1']
    #allocation4 [shape = 's32[2]{0}', space=sflag, size = 0x8, scoped, tag = 'scoped memory for tpu_custom_call.1']
    #allocation5 [shape = 'u8[262144]{0}', space=vmem, size = 0x40000, scoped, tag = 'input window, operand 1, single buffered']
    #allocation6 [shape = 's32[1]{0}', space=sflag, size = 0x4, scoped, tag = 'scoped memory for tpu_custom_call.1']
    #allocation7 [shape = 'u8[262144]{0}', space=vmem, size = 0x40000, scoped, tag = 'input window, operand 3, single buffered']
    #allocation8 [shape = 'u8[32768]{0}', space=vmem, size = 0x8000, scoped, tag = 'output window, operand 0']
    %10 = vsyncpa [#allocation3], 0
    %s11 = scalar_lea.sflag [#allocation3], 1
    %12 = vsyncpa %s11, 0
    %13 = vsyncpa [#allocation6], 0
    %14 = vsyncpa [#allocation4], 0
    %s15 = scalar_lea.sflag [#allocation4], 1
    %16 = vsyncpa %s15, 0
    loop: start=0, step=1, limit=4
    $region2: #{tpu_custom_call.1} parent=1 // loop_pre_header
      _
    $region3: #{tpu_custom_call.1} parent=1 // loop_header
      %s18 = sphi 0, %s22
      %p19 = scmp.ge.s32.totalorder %s18, 4
      %s28 = sphi 0, %s30
      %s31 = sphi 0, %s28
      %s32 = sphi 0, %s31
      %s48 = sphi 0, %s32
      %s52 = sphi 0, %s52
      %s54 = sphi 0, %s52
      %s55 = sphi 0, %s54
      %s69 = sphi 0, %s55
      %s73 = sphi 0, %s73
      %s75 = sphi 0, %s73
      %s76 = sphi 0, %s75
      %s90 = sphi 0, %s76
      %s94 = sphi 0, %s94
      %s96 = sphi 0, %s94
      %s97 = sphi 0, %s96
      %s111 = sphi 0, %s97
      %s115 = sphi 0, %s115
      %s117 = sphi 0, %s115
      %s118 = sphi 0, %s117
      %s132 = sphi 0, %s118
      %s138 = sphi 0, %s140
      %s141 = sphi 0, %s138
      %s142 = sphi 0, %s141
      %s158 = sphi 0, %s142
    $region4: #{tpu_custom_call.1} parent=1 // loop_header_branch
      %21 = sbr.rel (%p19) target = $region8
    $region5: #{tpu_custom_call.1} parent=1 // loop_body
      %s23 = ssub.s32 %s18, 1
      %s24 = ssub.s32 %s18, 2
      %s25 = sadd.s32 %s18, 1
      %s26 = ssub.s32 %s18, %s25
      %p27 = scmp.eq.s32.totalorder %s26, 0
      %s29 = sadd.s32 %s28, 1
      %s30 = scalar_select %p27, %s28, %s29
      %p33 = pneg %p27
      %p34 = scmp.eq.s32.totalorder %s18, 1
      %p35 = por %p33, %p34
      %p36 = scmp.ne.s32.totalorder %s28, %s31
      %p37 = scmp.eq.s32.totalorder %s18, 0
      %p38 = por %p36, %p37
      %p39 = scmp.ne.s32.totalorder %s28, %s31
      %p40 = scmp.eq.s32.totalorder %s23, 1
      %p41 = por %p39, %p40
      %p42 = scmp.ne.s32.totalorder %s31, %s32
      %p43 = scmp.eq.s32.totalorder %s23, 0
      %p44 = por %p42, %p43
      %p45 = scmp.ne.s32.totalorder %s31, %s32
      %p46 = scmp.eq.s32.totalorder %s24, 1
      %p47 = por %p45, %p46
      %p49 = scmp.ne.s32.totalorder %s32, %s48
      %p50 = scmp.eq.s32.totalorder %s24, 0
      %p51 = por %p49, %p50
      %s53 = sadd.s32 %s52, 1
      %p56 = scmp.eq.s32.totalorder %s18, 1
      %p57 = scmp.ne.s32.totalorder %s52, %s54
      %p58 = scmp.eq.s32.totalorder %s18, 0
      %p59 = por %p57, %p58
      %p60 = scmp.ne.s32.totalorder %s52, %s54
      %p61 = scmp.eq.s32.totalorder %s23, 1
      %p62 = por %p60, %p61
      %p63 = scmp.ne.s32.totalorder %s54, %s55
      %p64 = scmp.eq.s32.totalorder %s23, 0
      %p65 = por %p63, %p64
      %p66 = scmp.ne.s32.totalorder %s54, %s55
      %p67 = scmp.eq.s32.totalorder %s24, 1
      %p68 = por %p66, %p67
      %p70 = scmp.ne.s32.totalorder %s55, %s69
      %p71 = scmp.eq.s32.totalorder %s24, 0
      %p72 = por %p70, %p71
      %s74 = sadd.s32 %s73, 1
      %p77 = scmp.eq.s32.totalorder %s18, 1
      %p78 = scmp.ne.s32.totalorder %s73, %s75
      %p79 = scmp.eq.s32.totalorder %s18, 0
      %p80 = por %p78, %p79
      %p81 = scmp.ne.s32.totalorder %s73, %s75
      %p82 = scmp.eq.s32.totalorder %s23, 1
      %p83 = por %p81, %p82
      %p84 = scmp.ne.s32.totalorder %s75, %s76
      %p85 = scmp.eq.s32.totalorder %s23, 0
      %p86 = por %p84, %p85
      %p87 = scmp.ne.s32.totalorder %s75, %s76
      %p88 = scmp.eq.s32.totalorder %s24, 1
      %p89 = por %p87, %p88
      %p91 = scmp.ne.s32.totalorder %s76, %s90
      %p92 = scmp.eq.s32.totalorder %s24, 0
      %p93 = por %p91, %p92
      %s95 = sadd.s32 %s94, 1
      %p98 = scmp.eq.s32.totalorder %s18, 1
      %p99 = scmp.ne.s32.totalorder %s94, %s96
      %p100 = scmp.eq.s32.totalorder %s18, 0
      %p101 = por %p99, %p100
      %p102 = scmp.ne.s32.totalorder %s94, %s96
      %p103 = scmp.eq.s32.totalorder %s23, 1
      %p104 = por %p102, %p103
      %p105 = scmp.ne.s32.totalorder %s96, %s97
      %p106 = scmp.eq.s32.totalorder %s23, 0
      %p107 = por %p105, %p106
      %p108 = scmp.ne.s32.totalorder %s96, %s97
      %p109 = scmp.eq.s32.totalorder %s24, 1
      %p110 = por %p108, %p109
      %p112 = scmp.ne.s32.totalorder %s97, %s111
      %p113 = scmp.eq.s32.totalorder %s24, 0
      %p114 = por %p112, %p113
      %s116 = sadd.s32 %s115, 1
      %p119 = scmp.eq.s32.totalorder %s18, 1
      %p120 = scmp.ne.s32.totalorder %s115, %s117
      %p121 = scmp.eq.s32.totalorder %s18, 0
      %p122 = por %p120, %p121
      %p123 = scmp.ne.s32.totalorder %s115, %s117
      %p124 = scmp.eq.s32.totalorder %s23, 1
      %p125 = por %p123, %p124
      %p126 = scmp.ne.s32.totalorder %s117, %s118
      %p127 = scmp.eq.s32.totalorder %s23, 0
      %p128 = por %p126, %p127
      %p129 = scmp.ne.s32.totalorder %s117, %s118
      %p130 = scmp.eq.s32.totalorder %s24, 1
      %p131 = por %p129, %p130
      %p133 = scmp.ne.s32.totalorder %s118, %s132
      %p134 = scmp.eq.s32.totalorder %s24, 0
      %p135 = por %p133, %p134
      %s136 = ssub.s32 %s18, %s25
      %p137 = scmp.eq.s32.totalorder %s136, 0
      %s139 = sadd.s32 %s138, 1
      %s140 = scalar_select %p137, %s138, %s139
      %p143 = pneg %p137
      %p144 = scmp.eq.s32.totalorder %s18, 1
      %p145 = por %p143, %p144
      %p146 = scmp.ne.s32.totalorder %s138, %s141
      %p147 = scmp.eq.s32.totalorder %s18, 0
      %p148 = por %p146, %p147
      %p149 = scmp.ne.s32.totalorder %s138, %s141
      %p150 = scmp.eq.s32.totalorder %s23, 1
      %p151 = por %p149, %p150
      %p152 = scmp.ne.s32.totalorder %s141, %s142
      %p153 = scmp.eq.s32.totalorder %s23, 0
      %p154 = por %p152, %p153
      %p155 = scmp.ne.s32.totalorder %s141, %s142
      %p156 = scmp.eq.s32.totalorder %s24, 1
      %p157 = por %p155, %p156
      %p159 = scmp.ne.s32.totalorder %s142, %s158
      %p160 = scmp.eq.s32.totalorder %s24, 0
      %p161 = por %p159, %p160
      %p162 = scmp.le.s32.totalorder 1, %s18
      %p163 = scmp.lt.s32.totalorder %s18, 3
      %p164 = pnand %p162, %p163
      %p165 = pneg %p164
      // Predicated region
      $region9: #{tpu_custom_call.1} parent=5 // pred_check
        _
      $region10: #{tpu_custom_call.1} parent=5 // pred_check_branch
        %167 = sbr.rel (%p164) target = $region12
      $region11: #{tpu_custom_call.1} parent=5 // pred_region
        %s168 = ssub.s32 %s18, 1
        // Predicated region
        $region13: #{tpu_custom_call.1} parent=11 // pred_check
          %p169 = pneg %p65
        $region14: #{tpu_custom_call.1} parent=11 // pred_check_branch
          %171 = sbr.rel (%p169) target = $region16
        $region15: #{tpu_custom_call.1} parent=11 // pred_region
          %s173 = ssub.s32 8192, 8192
          %174 = vsyncadd [#allocation6], %s173
          %s175 = sshll.u32 [#allocation5], 4
          %s176 = int_to_ptr.vmem [resolvable:$true] %s175
          %181 = dma.hbm_to_vmem [thread:$0]  %s1, 8192, %s176, [#allocation6], 512, 512, 32
        $region16: #{tpu_custom_call.1} parent=11 // pred_fallthru
          _
        // Predicated region
        $region17: #{tpu_custom_call.1} parent=11 // pred_check
          %p182 = pneg %p86
        $region18: #{tpu_custom_call.1} parent=11 // pred_check_branch
          %184 = sbr.rel (%p182) target = $region20
        $region19: #{tpu_custom_call.1} parent=11 // pred_region
          _
        $region20: #{tpu_custom_call.1} parent=11 // pred_fallthru
          _
        // Predicated region
        $region21: #{tpu_custom_call.1} parent=11 // pred_check
          %p185 = pneg %p107
        $region22: #{tpu_custom_call.1} parent=11 // pred_check_branch
          %187 = sbr.rel (%p185) target = $region24
        $region23: #{tpu_custom_call.1} parent=11 // pred_region
          %s189 = ssub.s32 8192, 8192
          %190 = vsyncadd [#allocation6], %s189
          %s191 = sshll.u32 [#allocation7], 4
          %s192 = int_to_ptr.vmem [resolvable:$true] %s191
          %197 = dma.hbm_to_vmem [thread:$0]  %s3, 8192, %s192, [#allocation6], 128, 128, 8
        $region24: #{tpu_custom_call.1} parent=11 // pred_fallthru
          _
        // Predicated region
        $region25: #{tpu_custom_call.1} parent=11 // pred_check
          %p198 = pneg %p128
        $region26: #{tpu_custom_call.1} parent=11 // pred_check_branch
          %200 = sbr.rel (%p198) target = $region28
        $region27: #{tpu_custom_call.1} parent=11 // pred_region
          _
        $region28: #{tpu_custom_call.1} parent=11 // pred_fallthru
          _
      $region12: #{tpu_custom_call.1} parent=5 // pred_fallthru
        _
      %p201 = scmp.lt.s32.totalorder %s18, 2
      // Predicated region
      $region29: #{tpu_custom_call.1} parent=5 // pred_check
        %p202 = pneg %p201
      $region30: #{tpu_custom_call.1} parent=5 // pred_check_branch
        %204 = sbr.rel (%p202) target = $region32
      $region31: #{tpu_custom_call.1} parent=5 // pred_region
        // Predicated region
        $region33: #{tpu_custom_call.1} parent=31 // pred_check
          %p205 = pneg %p38
        $region34: #{tpu_custom_call.1} parent=31 // pred_check_branch
          %207 = sbr.rel (%p205) target = $region36
        $region35: #{tpu_custom_call.1} parent=31 // pred_region
          %s208 = sand.u32 %s28, 1
          %s209 = scalar_lea.sflag [#allocation3], %s208
          %s210 = sand.u32 %s28, 1
          %s211 = smul.addr %s210, 32
          %s212 = scalar_lea.vmem [#allocation2], %s211
          %s213 = smul.u32 4, %s18
          %s214 = ssub.s32 5, %s213
          %p215 = scmp.lt.s32.totalorder %s214, 4
          %s216 = scalar_select %p215, %s214, 4
          %s217 = smul.u32 128, %s216
          %s219 = ssub.s32 512, %s217
          %220 = vsyncadd %s209, %s219
          %p221 = scmp.ne.s32.totalorder 0, %s217
          %s222 = smul.addr %s213, 128
          %s223 = scalar_lea.hbm %s0, %s222
          %s224 = smul.u32 8, %s216
          %s225 = sshll.u32 %s212, 4
          %s226 = int_to_ptr.vmem [resolvable:$true] %s225
          %s227 = sshll.u32 %s224, 4
          %231 = dma.hbm_to_vmem [thread:$0]  (%p221), %s223, %s227, %s226, %s209, 128, 128, 8
        $region36: #{tpu_custom_call.1} parent=31 // pred_fallthru
          _
      $region32: #{tpu_custom_call.1} parent=5 // pred_fallthru
        _
      %p232 = scmp.le.s32.totalorder 1, %s18
      %p233 = scmp.lt.s32.totalorder %s18, 3
      %p234 = pnand %p232, %p233
      %p235 = pneg %p234
      // Predicated region
      $region37: #{tpu_custom_call.1} parent=5 // pred_check
        _
      $region38: #{tpu_custom_call.1} parent=5 // pred_check_branch
        %237 = sbr.rel (%p234) target = $region40
      $region39: #{tpu_custom_call.1} parent=5 // pred_region
        %s238 = ssub.s32 %s18, 1
        %s239 = sand.u32 %s31, 1
        %s240 = scalar_lea.sflag [#allocation3], %s239
        %s241 = sand.u32 %s31, 1
        %s242 = smul.addr %s241, 32
        %s243 = scalar_lea.vmem [#allocation2], %s242
        // Predicated region
        $region41: #{tpu_custom_call.1} parent=39 // pred_check
          %p244 = pneg %p44
        $region42: #{tpu_custom_call.1} parent=39 // pred_check_branch
          %246 = sbr.rel (%p244) target = $region44
        $region43: #{tpu_custom_call.1} parent=39 // pred_region
          %247 = dma.done %s240, 512
        $region44: #{tpu_custom_call.1} parent=39 // pred_fallthru
          _
        // Predicated region
        $region45: #{tpu_custom_call.1} parent=39 // pred_check
          %p248 = pneg %p65
        $region46: #{tpu_custom_call.1} parent=39 // pred_check_branch
          %250 = sbr.rel (%p248) target = $region48
        $region47: #{tpu_custom_call.1} parent=39 // pred_region
          %251 = dma.done [#allocation6], 8192
        $region48: #{tpu_custom_call.1} parent=39 // pred_fallthru
          _
        // Predicated region
        $region49: #{tpu_custom_call.1} parent=39 // pred_check
          %p252 = pneg %p107
        $region50: #{tpu_custom_call.1} parent=39 // pred_check_branch
          %254 = sbr.rel (%p252) target = $region52
        $region51: #{tpu_custom_call.1} parent=39 // pred_region
          %255 = dma.done [#allocation6], 8192
        $region52: #{tpu_custom_call.1} parent=39 // pred_fallthru
          _
        %s256 = sand.u32 %s31, 1
        %s257 = scalar_lea.sflag [#allocation3], %s256
        %s258 = sand.u32 %s31, 1
        %s259 = smul.addr %s258, 32
        %s260 = scalar_lea.vmem [#allocation2], %s259
        %p261 = pneg %p44
        %p262 = pneg %p41
        %p263 = pneg %p65
        %p264 = pneg %p62
        %p265 = pneg %p86
        %p266 = pneg %p83
        %p267 = pneg %p107
        %p268 = pneg %p104
        %p269 = pneg %p128
        %p270 = pneg %p125
        %p271 = pneg %p154
        %p272 = pneg %p151
        %s273 = sand.u32 %s141, 1
        %s274 = scalar_lea.sflag [#allocation4], %s273
        %s275 = sand.u32 %s141, 1
        %s276 = smul.addr %s275, 32
        %s277 = scalar_lea.vmem [#allocation8], %s276
        %s278 = smul.u32 4, %s23
        %s279 = ssub.s32 5, %s278
        %p280 = scmp.lt.s32.totalorder %s279, 4
        %s281 = scalar_select %p280, %s279, 4
        %s282 = smul.u32 128, %s281
        %s283 = smul.u32 4, %s23
        %s284 = ssub.s32 5, %s283
        %p285 = scmp.lt.s32.totalorder %s284, 4
        %s286 = scalar_select %p285, %s284, 4
        %s287 = smul.u32 128, %s286
        %v288 = vld [vmem:[%s243] sm:$0xff]
        %v289 = vld [vmem:[%s243 + $0x8] sm:$0xff]
        %v290 = vld [vmem:[%s243 + $0x10] sm:$0xff]
        %v291 = vld [vmem:[%s243 + $0x18] sm:$0xff]
        %v292 = vld [vmem:[#allocation5] sm:$0xff]
        %v293 = vld [vmem:[#allocation5 + $0x8] sm:$0xff]
        %v294 = vld [vmem:[#allocation5 + $0x10] sm:$0xff]
        %v295 = vld [vmem:[#allocation5 + $0x18] sm:$0xff]
        %v296 = vld [vmem:[#allocation5 + $0x20] sm:$0xff]
        %v297 = vld [vmem:[#allocation5 + $0x28] sm:$0xff]
        %v298 = vld [vmem:[#allocation5 + $0x30] sm:$0xff]
        %v299 = vld [vmem:[#allocation5 + $0x38] sm:$0xff]
        %v300 = vld [vmem:[#allocation5 + $0x40] sm:$0xff]
        %v301 = vld [vmem:[#allocation5 + $0x48] sm:$0xff]
        %v302 = vld [vmem:[#allocation5 + $0x50] sm:$0xff]
        %v303 = vld [vmem:[#allocation5 + $0x58] sm:$0xff]
        %v304 = vld [vmem:[#allocation5 + $0x60] sm:$0xff]
        %v305 = vld [vmem:[#allocation5 + $0x68] sm:$0xff]
        %v306 = vld [vmem:[#allocation5 + $0x70] sm:$0xff]
        %v307 = vld [vmem:[#allocation5 + $0x78] sm:$0xff]
        %v308 = vld [vmem:[#allocation5 + $0x80] sm:$0xff]
        %v309 = vld [vmem:[#allocation5 + $0x88] sm:$0xff]
        %v310 = vld [vmem:[#allocation5 + $0x90] sm:$0xff]
        %v311 = vld [vmem:[#allocation5 + $0x98] sm:$0xff]
        %v312 = vld [vmem:[#allocation5 + $0xa0] sm:$0xff]
        %v313 = vld [vmem:[#allocation5 + $0xa8] sm:$0xff]
        %v314 = vld [vmem:[#allocation5 + $0xb0] sm:$0xff]
        %v315 = vld [vmem:[#allocation5 + $0xb8] sm:$0xff]
        %v316 = vld [vmem:[#allocation5 + $0xc0] sm:$0xff]
        %v317 = vld [vmem:[#allocation5 + $0xc8] sm:$0xff]
        %v318 = vld [vmem:[#allocation5 + $0xd0] sm:$0xff]
        %v319 = vld [vmem:[#allocation5 + $0xd8] sm:$0xff]
        %v320 = vld [vmem:[#allocation5 + $0xe0] sm:$0xff]
        %v321 = vld [vmem:[#allocation5 + $0xe8] sm:$0xff]
        %v322 = vld [vmem:[#allocation5 + $0xf0] sm:$0xff]
        %v323 = vld [vmem:[#allocation5 + $0xf8] sm:$0xff]
        %v324 = vld [vmem:[#allocation5 + $0x100] sm:$0xff]
        %v325 = vld [vmem:[#allocation5 + $0x108] sm:$0xff]
        %v326 = vld [vmem:[#allocation5 + $0x110] sm:$0xff]
        %v327 = vld [vmem:[#allocation5 + $0x118] sm:$0xff]
        %v328 = vld [vmem:[#allocation5 + $0x120] sm:$0xff]
        %v329 = vld [vmem:[#allocation5 + $0x128] sm:$0xff]
        %v330 = vld [vmem:[#allocation5 + $0x130] sm:$0xff]
        %v331 = vld [vmem:[#allocation5 + $0x138] sm:$0xff]
        %v332 = vld [vmem:[#allocation5 + $0x140] sm:$0xff]
        %v333 = vld [vmem:[#allocation5 + $0x148] sm:$0xff]
        %v334 = vld [vmem:[#allocation5 + $0x150] sm:$0xff]
        %v335 = vld [vmem:[#allocation5 + $0x158] sm:$0xff]
        %v336 = vld [vmem:[#allocation5 + $0x160] sm:$0xff]
        %v337 = vld [vmem:[#allocation5 + $0x168] sm:$0xff]
        %v338 = vld [vmem:[#allocation5 + $0x170] sm:$0xff]
        %v339 = vld [vmem:[#allocation5 + $0x178] sm:$0xff]
        %v340 = vld [vmem:[#allocation5 + $0x180] sm:$0xff]
        %v341 = vld [vmem:[#allocation5 + $0x188] sm:$0xff]
        %v342 = vld [vmem:[#allocation5 + $0x190] sm:$0xff]
        %v343 = vld [vmem:[#allocation5 + $0x198] sm:$0xff]
        %v344 = vld [vmem:[#allocation5 + $0x1a0] sm:$0xff]
        %v345 = vld [vmem:[#allocation5 + $0x1a8] sm:$0xff]
        %v346 = vld [vmem:[#allocation5 + $0x1b0] sm:$0xff]
        %v347 = vld [vmem:[#allocation5 + $0x1b8] sm:$0xff]
        %v348 = vld [vmem:[#allocation5 + $0x1c0] sm:$0xff]
        %v349 = vld [vmem:[#allocation5 + $0x1c8] sm:$0xff]
        %v350 = vld [vmem:[#allocation5 + $0x1d0] sm:$0xff]
        %v351 = vld [vmem:[#allocation5 + $0x1d8] sm:$0xff]
        %v352 = vld [vmem:[#allocation5 + $0x1e0] sm:$0xff]
        %v353 = vld [vmem:[#allocation5 + $0x1e8] sm:$0xff]
        %v354 = vld [vmem:[#allocation5 + $0x1f0] sm:$0xff]
        %v355 = vld [vmem:[#allocation5 + $0x1f8] sm:$0xff]
        %v356 = vld [vmem:[%s2] sm:$0xf]
        %v358 = vlaneseq
        %v359 = vshrl.u32 %v358, 7
        %v360 = vsub.s32 0, %v359
        %v361 = vrot.slane %v356, %v360
        %v362 = vlaneseq
        %v363 = vshrl.u32 %v362, 7
        %v364 = vsub.s32 1, %v363
        %v365 = vrot.slane %v356, %v364
        %v366 = vlaneseq
        %v367 = vshrl.u32 %v366, 7
        %v368 = vsub.s32 2, %v367
        %v369 = vrot.slane %v356, %v368
        %v370 = vlaneseq
        %v371 = vshrl.u32 %v370, 7
        %v372 = vsub.s32 3, %v371
        %v373 = vrot.slane %v356, %v372
        %378 = vmatprep.subr.mxu0 %v293
        %379 = vmatpush1.msra.mxu0 %v292
        %380 = vmatprep.subr.mxu0 %v297
        %381 = vmatpush1.msra.mxu0 %v296
        %382 = vmatprep.subr.mxu0 %v301
        %383 = vmatpush1.msra.mxu0 %v300
        %384 = vmatprep.subr.mxu0 %v305
        %385 = vmatpush1.msra.mxu0 %v304
        %386 = vmatprep.subr.mxu0 %v309
        %387 = vmatpush1.msra.mxu0 %v308
        %388 = vmatprep.subr.mxu0 %v313
        %389 = vmatpush1.msra.mxu0 %v312
        %390 = vmatprep.subr.mxu0 %v317
        %391 = vmatpush1.msra.mxu0 %v316
        %392 = vmatprep.subr.mxu0 %v321
        %393 = vmatpush1.msra.mxu0 %v320
        %394 = vmatprep.subr.mxu0 %v325
        %395 = vmatpush1.msra.mxu0 %v324
        %396 = vmatprep.subr.mxu0 %v329
        %397 = vmatpush1.msra.mxu0 %v328
        %398 = vmatprep.subr.mxu0 %v333
        %399 = vmatpush1.msra.mxu0 %v332
        %400 = vmatprep.subr.mxu0 %v337
        %401 = vmatpush1.msra.mxu0 %v336
        %402 = vmatprep.subr.mxu0 %v341
        %403 = vmatpush1.msra.mxu0 %v340
        %404 = vmatprep.subr.mxu0 %v345
        %405 = vmatpush1.msra.mxu0 %v344
        %406 = vmatprep.subr.mxu0 %v349
        %407 = vmatpush1.msra.mxu0 %v348
        %408 = vmatprep.subr.mxu0 %v353
        %409 = vmatpush1.msra.mxu0 %v352
        %410 = vmatprep.subr.mxu0 0.0
        %411 = vmatpush1.msra.mxu0 0.0
        %412 = vmatprep.subr.mxu0 0.0
        %413 = vmatpush1.msra.mxu0 0.0
        %414 = vmatprep.subr.mxu0 0.0
        %415 = vmatpush1.msra.mxu0 0.0
        %416 = vmatprep.subr.mxu0 0.0
        %417 = vmatpush1.msra.mxu0 0.0
        %418 = vmatprep.subr.mxu0 0.0
        %419 = vmatpush1.msra.mxu0 0.0
        %420 = vmatprep.subr.mxu0 0.0
        %421 = vmatpush1.msra.mxu0 0.0
        %422 = vmatprep.subr.mxu0 0.0
        %423 = vmatpush1.msra.mxu0 0.0
        %424 = vmatprep.subr.mxu0 0.0
        %425 = vmatpush1.msra.mxu0 0.0
        %426 = vmatprep.subr.mxu0 0.0
        %427 = vmatpush1.msra.mxu0 0.0
        %428 = vmatprep.subr.mxu0 0.0
        %429 = vmatpush1.msra.mxu0 0.0
        %430 = vmatprep.subr.mxu0 0.0
        %431 = vmatpush1.msra.mxu0 0.0
        %432 = vmatprep.subr.mxu0 0.0
        %433 = vmatpush1.msra.mxu0 0.0
        %434 = vmatprep.subr.mxu0 0.0
        %435 = vmatpush1.msra.mxu0 0.0
        %436 = vmatprep.subr.mxu0 0.0
        %437 = vmatpush1.msra.mxu0 0.0
        %438 = vmatprep.subr.mxu0 0.0
        %439 = vmatpush1.msra.mxu0 0.0
        %440 = vmatprep.subr.mxu0 0.0
        %441 = vmatpush1.msra.mxu0 0.0
        %442 = vmatprep.mubr.f32.mxu0 0.0
        %443 = vmatmul.mubr.f32.gmra.mrb[0].mxu0 %v288
        %v444 = vpop.f32.mrb[0].mxu0
        %v445 = vadd.f32 %v361, %v444
        %v446 = vpop.f32.mrb[0].mxu0
        %v447 = vadd.f32 %v365, %v446
        %448 = vmatprep.mubr.f32.mxu0 0.0
        %449 = vmatmul.mubr.f32.gmra.mrb[0].mxu0 %v289
        %v450 = vpop.f32.mrb[0].mxu0
        %v451 = vadd.f32 %v361, %v450
        %v452 = vpop.f32.mrb[0].mxu0
        %v453 = vadd.f32 %v365, %v452
        %454 = vmatprep.mubr.f32.mxu0 0.0
        %455 = vmatmul.mubr.f32.gmra.mrb[0].mxu0 %v290
        %v456 = vpop.f32.mrb[0].mxu0
        %v457 = vadd.f32 %v361, %v456
        %v458 = vpop.f32.mrb[0].mxu0
        %v459 = vadd.f32 %v365, %v458
        %460 = vmatprep.mubr.f32.mxu0 0.0
        %461 = vmatmul.mubr.f32.gmra.mrb[0].mxu0 %v291
        %v462 = vpop.f32.mrb[0].mxu0
        %v463 = vadd.f32 %v361, %v462
        %v464 = vpop.f32.mrb[0].mxu0
        %v465 = vadd.f32 %v365, %v464
        %466 = vdwg.mxu0
        %467 = vmatprep.subr.mxu0 %v295
        %468 = vmatpush1.msra.mxu0 %v294
        %469 = vmatprep.subr.mxu0 %v299
        %470 = vmatpush1.msra.mxu0 %v298
        %471 = vmatprep.subr.mxu0 %v303
        %472 = vmatpush1.msra.mxu0 %v302
        %473 = vmatprep.subr.mxu0 %v307
        %474 = vmatpush1.msra.mxu0 %v306
        %475 = vmatprep.subr.mxu0 %v311
        %476 = vmatpush1.msra.mxu0 %v310
        %477 = vmatprep.subr.mxu0 %v315
        %478 = vmatpush1.msra.mxu0 %v314
        %479 = vmatprep.subr.mxu0 %v319
        %480 = vmatpush1.msra.mxu0 %v318
        %481 = vmatprep.subr.mxu0 %v323
        %482 = vmatpush1.msra.mxu0 %v322
        %483 = vmatprep.subr.mxu0 %v327
        %484 = vmatpush1.msra.mxu0 %v326
        %485 = vmatprep.subr.mxu0 %v331
        %486 = vmatpush1.msra.mxu0 %v330
        %487 = vmatprep.subr.mxu0 %v335
        %488 = vmatpush1.msra.mxu0 %v334
        %489 = vmatprep.subr.mxu0 %v339
        %490 = vmatpush1.msra.mxu0 %v338
        %491 = vmatprep.subr.mxu0 %v343
        %492 = vmatpush1.msra.mxu0 %v342
        %493 = vmatprep.subr.mxu0 %v347
        %494 = vmatpush1.msra.mxu0 %v346
        %495 = vmatprep.subr.mxu0 %v351
        %496 = vmatpush1.msra.mxu0 %v350
        %497 = vmatprep.subr.mxu0 %v355
        %498 = vmatpush1.msra.mxu0 %v354
        %499 = vmatprep.subr.mxu0 0.0
        %500 = vmatpush1.msra.mxu0 0.0
        %501 = vmatprep.subr.mxu0 0.0
        %502 = vmatpush1.msra.mxu0 0.0
        %503 = vmatprep.subr.mxu0 0.0
        %504 = vmatpush1.msra.mxu0 0.0
        %505 = vmatprep.subr.mxu0 0.0
        %506 = vmatpush1.msra.mxu0 0.0
        %507 = vmatprep.subr.mxu0 0.0
        %508 = vmatpush1.msra.mxu0 0.0
        %509 = vmatprep.subr.mxu0 0.0
        %510 = vmatpush1.msra.mxu0 0.0
        %511 = vmatprep.subr.mxu0 0.0
        %512 = vmatpush1.msra.mxu0 0.0
        %513 = vmatprep.subr.mxu0 0.0
        %514 = vmatpush1.msra.mxu0 0.0
        %515 = vmatprep.subr.mxu0 0.0
        %516 = vmatpush1.msra.mxu0 0.0
        %517 = vmatprep.subr.mxu0 0.0
        %518 = vmatpush1.msra.mxu0 0.0
        %519 = vmatprep.subr.mxu0 0.0
        %520 = vmatpush1.msra.mxu0 0.0
        %521 = vmatprep.subr.mxu0 0.0
        %522 = vmatpush1.msra.mxu0 0.0
        %523 = vmatprep.subr.mxu0 0.0
        %524 = vmatpush1.msra.mxu0 0.0
        %525 = vmatprep.subr.mxu0 0.0
        %526 = vmatpush1.msra.mxu0 0.0
        %527 = vmatprep.subr.mxu0 0.0
        %528 = vmatpush1.msra.mxu0 0.0
        %529 = vmatprep.subr.mxu0 0.0
        %530 = vmatpush1.msra.mxu0 0.0
        %531 = vmatprep.mubr.f32.mxu0 0.0
        %532 = vmatmul.mubr.f32.gmra.mrb[0].mxu0 %v288
        %v533 = vpop.f32.mrb[0].mxu0
        %v534 = vadd.f32 %v369, %v533
        %v535 = vpop.f32.mrb[0].mxu0
        %v536 = vadd.f32 %v373, %v535
        %537 = vmatprep.mubr.f32.mxu0 0.0
        %538 = vmatmul.mubr.f32.gmra.mrb[0].mxu0 %v289
        %v539 = vpop.f32.mrb[0].mxu0
        %v540 = vadd.f32 %v369, %v539
        %v541 = vpop.f32.mrb[0].mxu0
        %v542 = vadd.f32 %v373, %v541
        %543 = vmatprep.mubr.f32.mxu0 0.0
        %544 = vmatmul.mubr.f32.gmra.mrb[0].mxu0 %v290
        %v545 = vpop.f32.mrb[0].mxu0
        %v546 = vadd.f32 %v369, %v545
        %v547 = vpop.f32.mrb[0].mxu0
        %v548 = vadd.f32 %v373, %v547
        %549 = vmatprep.mubr.f32.mxu0 0.0
        %550 = vmatmul.mubr.f32.gmra.mrb[0].mxu0 %v291
        %v551 = vpop.f32.mrb[0].mxu0
        %v552 = vadd.f32 %v369, %v551
        %v553 = vpop.f32.mrb[0].mxu0
        %v554 = vadd.f32 %v373, %v553
        %555 = vdwg.mxu0
        %v556 = vmax.f32 %v445, 0.0
        %v557 = vmax.f32 %v447, 0.0
        %v558 = vmax.f32 %v534, 0.0
        %v559 = vmax.f32 %v536, 0.0
        %v560 = vmax.f32 %v451, 0.0
        %v561 = vmax.f32 %v453, 0.0
        %v562 = vmax.f32 %v540, 0.0
        %v563 = vmax.f32 %v542, 0.0
        %v564 = vmax.f32 %v457, 0.0
        %v565 = vmax.f32 %v459, 0.0
        %v566 = vmax.f32 %v546, 0.0
        %v567 = vmax.f32 %v548, 0.0
        %v568 = vmax.f32 %v463, 0.0
        %v569 = vmax.f32 %v465, 0.0
        %v570 = vmax.f32 %v552, 0.0
        %v571 = vmax.f32 %v554, 0.0
        %v572 = vld [vmem:[#allocation7] sm:$0xff]
        %v573 = vld [vmem:[#allocation7 + $0x8] sm:$0xff]
        %v574 = vld [vmem:[#allocation7 + $0x10] sm:$0xff]
        %v575 = vld [vmem:[#allocation7 + $0x18] sm:$0xff]
        %v576 = vld [vmem:[#allocation7 + $0x20] sm:$0xff]
        %v577 = vld [vmem:[#allocation7 + $0x28] sm:$0xff]
        %v578 = vld [vmem:[#allocation7 + $0x30] sm:$0xff]
        %v579 = vld [vmem:[#allocation7 + $0x38] sm:$0xff]
        %v580 = vld [vmem:[#allocation7 + $0x40] sm:$0xff]
        %v581 = vld [vmem:[#allocation7 + $0x48] sm:$0xff]
        %v582 = vld [vmem:[#allocation7 + $0x50] sm:$0xff]
        %v583 = vld [vmem:[#allocation7 + $0x58] sm:$0xff]
        %v584 = vld [vmem:[#allocation7 + $0x60] sm:$0xff]
        %v585 = vld [vmem:[#allocation7 + $0x68] sm:$0xff]
        %v586 = vld [vmem:[#allocation7 + $0x70] sm:$0xff]
        %v587 = vld [vmem:[#allocation7 + $0x78] sm:$0xff]
        %v588 = vld [vmem:[#allocation7 + $0x80] sm:$0xff]
        %v589 = vld [vmem:[#allocation7 + $0x88] sm:$0xff]
        %v590 = vld [vmem:[#allocation7 + $0x90] sm:$0xff]
        %v591 = vld [vmem:[#allocation7 + $0x98] sm:$0xff]
        %v592 = vld [vmem:[#allocation7 + $0xa0] sm:$0xff]
        %v593 = vld [vmem:[#allocation7 + $0xa8] sm:$0xff]
        %v594 = vld [vmem:[#allocation7 + $0xb0] sm:$0xff]
        %v595 = vld [vmem:[#allocation7 + $0xb8] sm:$0xff]
        %v596 = vld [vmem:[#allocation7 + $0xc0] sm:$0xff]
        %v597 = vld [vmem:[#allocation7 + $0xc8] sm:$0xff]
        %v598 = vld [vmem:[#allocation7 + $0xd0] sm:$0xff]
        %v599 = vld [vmem:[#allocation7 + $0xd8] sm:$0xff]
        %v600 = vld [vmem:[#allocation7 + $0xe0] sm:$0xff]
        %v601 = vld [vmem:[#allocation7 + $0xe8] sm:$0xff]
        %v602 = vld [vmem:[#allocation7 + $0xf0] sm:$0xff]
        %v603 = vld [vmem:[#allocation7 + $0xf8] sm:$0xff]
        %v604 = vld [vmem:[#allocation7 + $0x100] sm:$0xff]
        %v605 = vld [vmem:[#allocation7 + $0x108] sm:$0xff]
        %v606 = vld [vmem:[#allocation7 + $0x110] sm:$0xff]
        %v607 = vld [vmem:[#allocation7 + $0x118] sm:$0xff]
        %v608 = vld [vmem:[#allocation7 + $0x120] sm:$0xff]
        %v609 = vld [vmem:[#allocation7 + $0x128] sm:$0xff]
        %v610 = vld [vmem:[#allocation7 + $0x130] sm:$0xff]
        %v611 = vld [vmem:[#allocation7 + $0x138] sm:$0xff]
        %v612 = vld [vmem:[#allocation7 + $0x140] sm:$0xff]
        %v613 = vld [vmem:[#allocation7 + $0x148] sm:$0xff]
        %v614 = vld [vmem:[#allocation7 + $0x150] sm:$0xff]
        %v615 = vld [vmem:[#allocation7 + $0x158] sm:$0xff]
        %v616 = vld [vmem:[#allocation7 + $0x160] sm:$0xff]
        %v617 = vld [vmem:[#allocation7 + $0x168] sm:$0xff]
        %v618 = vld [vmem:[#allocation7 + $0x170] sm:$0xff]
        %v619 = vld [vmem:[#allocation7 + $0x178] sm:$0xff]
        %v620 = vld [vmem:[#allocation7 + $0x180] sm:$0xff]
        %v621 = vld [vmem:[#allocation7 + $0x188] sm:$0xff]
        %v622 = vld [vmem:[#allocation7 + $0x190] sm:$0xff]
        %v623 = vld [vmem:[#allocation7 + $0x198] sm:$0xff]
        %v624 = vld [vmem:[#allocation7 + $0x1a0] sm:$0xff]
        %v625 = vld [vmem:[#allocation7 + $0x1a8] sm:$0xff]
        %v626 = vld [vmem:[#allocation7 + $0x1b0] sm:$0xff]
        %v627 = vld [vmem:[#allocation7 + $0x1b8] sm:$0xff]
        %v628 = vld [vmem:[#allocation7 + $0x1c0] sm:$0xff]
        %v629 = vld [vmem:[#allocation7 + $0x1c8] sm:$0xff]
        %v630 = vld [vmem:[#allocation7 + $0x1d0] sm:$0xff]
        %v631 = vld [vmem:[#allocation7 + $0x1d8] sm:$0xff]
        %v632 = vld [vmem:[#allocation7 + $0x1e0] sm:$0xff]
        %v633 = vld [vmem:[#allocation7 + $0x1e8] sm:$0xff]
        %v634 = vld [vmem:[#allocation7 + $0x1f0] sm:$0xff]
        %v635 = vld [vmem:[#allocation7 + $0x1f8] sm:$0xff]
        %v636 = vld [vmem:[%s4] sm:$0x1]
        %v638 = vlaneseq
        %v639 = vshrl.u32 %v638, 7
        %v640 = vsub.s32 0, %v639
        %v641 = vrot.slane %v636, %v640
        %643 = vmatprep.subr.mxu0 0.0
        %644 = vmatpush1.msra.mxu0 %v572
        %645 = vmatprep.subr.mxu0 0.0
        %646 = vmatpush1.msra.mxu0 %v573
        %647 = vmatprep.subr.mxu0 0.0
        %648 = vmatpush1.msra.mxu0 %v574
        %649 = vmatprep.subr.mxu0 0.0
        %650 = vmatpush1.msra.mxu0 %v575
        %651 = vmatprep.subr.mxu0 0.0
        %652 = vmatpush1.msra.mxu0 %v576
        %653 = vmatprep.subr.mxu0 0.0
        %654 = vmatpush1.msra.mxu0 %v577
        %655 = vmatprep.subr.mxu0 0.0
        %656 = vmatpush1.msra.mxu0 %v578
        %657 = vmatprep.subr.mxu0 0.0
        %658 = vmatpush1.msra.mxu0 %v579
        %659 = vmatprep.subr.mxu0 0.0
        %660 = vmatpush1.msra.mxu0 %v580
        %661 = vmatprep.subr.mxu0 0.0
        %662 = vmatpush1.msra.mxu0 %v581
        %663 = vmatprep.subr.mxu0 0.0
        %664 = vmatpush1.msra.mxu0 %v582
        %665 = vmatprep.subr.mxu0 0.0
        %666 = vmatpush1.msra.mxu0 %v583
        %667 = vmatprep.subr.mxu0 0.0
        %668 = vmatpush1.msra.mxu0 %v584
        %669 = vmatprep.subr.mxu0 0.0
        %670 = vmatpush1.msra.mxu0 %v585
        %671 = vmatprep.subr.mxu0 0.0
        %672 = vmatpush1.msra.mxu0 %v586
        %673 = vmatprep.subr.mxu0 0.0
        %674 = vmatpush1.msra.mxu0 %v587
        %675 = vmatprep.subr.mxu0 0.0
        %676 = vmatpush1.msra.mxu0 %v588
        %677 = vmatprep.subr.mxu0 0.0
        %678 = vmatpush1.msra.mxu0 %v589
        %679 = vmatprep.subr.mxu0 0.0
        %680 = vmatpush1.msra.mxu0 %v590
        %681 = vmatprep.subr.mxu0 0.0
        %682 = vmatpush1.msra.mxu0 %v591
        %683 = vmatprep.subr.mxu0 0.0
        %684 = vmatpush1.msra.mxu0 %v592
        %685 = vmatprep.subr.mxu0 0.0
        %686 = vmatpush1.msra.mxu0 %v593
        %687 = vmatprep.subr.mxu0 0.0
        %688 = vmatpush1.msra.mxu0 %v594
        %689 = vmatprep.subr.mxu0 0.0
        %690 = vmatpush1.msra.mxu0 %v595
        %691 = vmatprep.subr.mxu0 0.0
        %692 = vmatpush1.msra.mxu0 %v596
        %693 = vmatprep.subr.mxu0 0.0
        %694 = vmatpush1.msra.mxu0 %v597
        %695 = vmatprep.subr.mxu0 0.0
        %696 = vmatpush1.msra.mxu0 %v598
        %697 = vmatprep.subr.mxu0 0.0
        %698 = vmatpush1.msra.mxu0 %v599
        %699 = vmatprep.subr.mxu0 0.0
        %700 = vmatpush1.msra.mxu0 %v600
        %701 = vmatprep.subr.mxu0 0.0
        %702 = vmatpush1.msra.mxu0 %v601
        %703 = vmatprep.subr.mxu0 0.0
        %704 = vmatpush1.msra.mxu0 %v602
        %705 = vmatprep.subr.mxu0 0.0
        %706 = vmatpush1.msra.mxu0 %v603
        %707 = vmatprep.mubr.f32.mxu0 %v557
        %708 = vmatmul.mubr.f32.gmra.mrb[0].mxu0 %v556
        %v709 = vpop.f32.mrb[0].mxu0
        %v710 = vadd.f32 %v641, %v709
        %v711 = vpop.f32.mrb[0].mxu0
        %712 = vmatprep.mubr.f32.mxu0 %v561
        %713 = vmatmul.mubr.f32.gmra.mrb[0].mxu0 %v560
        %v714 = vpop.f32.mrb[0].mxu0
        %v715 = vadd.f32 %v641, %v714
        %v716 = vpop.f32.mrb[0].mxu0
        %717 = vmatprep.mubr.f32.mxu0 %v565
        %718 = vmatmul.mubr.f32.gmra.mrb[0].mxu0 %v564
        %v719 = vpop.f32.mrb[0].mxu0
        %v720 = vadd.f32 %v641, %v719
        %v721 = vpop.f32.mrb[0].mxu0
        %722 = vmatprep.mubr.f32.mxu0 %v569
        %723 = vmatmul.mubr.f32.gmra.mrb[0].mxu0 %v568
        %v724 = vpop.f32.mrb[0].mxu0
        %v725 = vadd.f32 %v641, %v724
        %v726 = vpop.f32.mrb[0].mxu0
        %727 = vdwg.mxu0
        %728 = vmatprep.subr.mxu0 0.0
        %729 = vmatpush1.msra.mxu0 %v604
        %730 = vmatprep.subr.mxu0 0.0
        %731 = vmatpush1.msra.mxu0 %v605
        %732 = vmatprep.subr.mxu0 0.0
        %733 = vmatpush1.msra.mxu0 %v606
        %734 = vmatprep.subr.mxu0 0.0
        %735 = vmatpush1.msra.mxu0 %v607
        %736 = vmatprep.subr.mxu0 0.0
        %737 = vmatpush1.msra.mxu0 %v608
        %738 = vmatprep.subr.mxu0 0.0
        %739 = vmatpush1.msra.mxu0 %v609
        %740 = vmatprep.subr.mxu0 0.0
        %741 = vmatpush1.msra.mxu0 %v610
        %742 = vmatprep.subr.mxu0 0.0
        %743 = vmatpush1.msra.mxu0 %v611
        %744 = vmatprep.subr.mxu0 0.0
        %745 = vmatpush1.msra.mxu0 %v612
        %746 = vmatprep.subr.mxu0 0.0
        %747 = vmatpush1.msra.mxu0 %v613
        %748 = vmatprep.subr.mxu0 0.0
        %749 = vmatpush1.msra.mxu0 %v614
        %750 = vmatprep.subr.mxu0 0.0
        %751 = vmatpush1.msra.mxu0 %v615
        %752 = vmatprep.subr.mxu0 0.0
        %753 = vmatpush1.msra.mxu0 %v616
        %754 = vmatprep.subr.mxu0 0.0
        %755 = vmatpush1.msra.mxu0 %v617
        %756 = vmatprep.subr.mxu0 0.0
        %757 = vmatpush1.msra.mxu0 %v618
        %758 = vmatprep.subr.mxu0 0.0
        %759 = vmatpush1.msra.mxu0 %v619
        %760 = vmatprep.subr.mxu0 0.0
        %761 = vmatpush1.msra.mxu0 %v620
        %762 = vmatprep.subr.mxu0 0.0
        %763 = vmatpush1.msra.mxu0 %v621
        %764 = vmatprep.subr.mxu0 0.0
        %765 = vmatpush1.msra.mxu0 %v622
        %766 = vmatprep.subr.mxu0 0.0
        %767 = vmatpush1.msra.mxu0 %v623
        %768 = vmatprep.subr.mxu0 0.0
        %769 = vmatpush1.msra.mxu0 %v624
        %770 = vmatprep.subr.mxu0 0.0
        %771 = vmatpush1.msra.mxu0 %v625
        %772 = vmatprep.subr.mxu0 0.0
        %773 = vmatpush1.msra.mxu0 %v626
        %774 = vmatprep.subr.mxu0 0.0
        %775 = vmatpush1.msra.mxu0 %v627
        %776 = vmatprep.subr.mxu0 0.0
        %777 = vmatpush1.msra.mxu0 %v628
        %778 = vmatprep.subr.mxu0 0.0
        %779 = vmatpush1.msra.mxu0 %v629
        %780 = vmatprep.subr.mxu0 0.0
        %781 = vmatpush1.msra.mxu0 %v630
        %782 = vmatprep.subr.mxu0 0.0
        %783 = vmatpush1.msra.mxu0 %v631
        %784 = vmatprep.subr.mxu0 0.0
        %785 = vmatpush1.msra.mxu0 %v632
        %786 = vmatprep.subr.mxu0 0.0
        %787 = vmatpush1.msra.mxu0 %v633
        %788 = vmatprep.subr.mxu0 0.0
        %789 = vmatpush1.msra.mxu0 %v634
        %790 = vmatprep.subr.mxu0 0.0
        %791 = vmatpush1.msra.mxu0 %v635
        %792 = vmatprep.mubr.f32.mxu0 %v559
        %793 = vmatmul.mubr.f32.gmra.mrb[0].mxu0 %v558
        %v794 = vpop.f32.mrb[0].mxu0
        %v795 = vadd.f32 %v710, %v794
        %v796 = vpop.f32.mrb[0].mxu0
        %797 = vmatprep.mubr.f32.mxu0 %v563
        %798 = vmatmul.mubr.f32.gmra.mrb[0].mxu0 %v562
        %v799 = vpop.f32.mrb[0].mxu0
        %v800 = vadd.f32 %v715, %v799
        %v801 = vpop.f32.mrb[0].mxu0
        %802 = vmatprep.mubr.f32.mxu0 %v567
        %803 = vmatmul.mubr.f32.gmra.mrb[0].mxu0 %v566
        %v804 = vpop.f32.mrb[0].mxu0
        %v805 = vadd.f32 %v720, %v804
        %v806 = vpop.f32.mrb[0].mxu0
        %807 = vmatprep.mubr.f32.mxu0 %v571
        %808 = vmatmul.mubr.f32.gmra.mrb[0].mxu0 %v570
        %v809 = vpop.f32.mrb[0].mxu0
        %v810 = vadd.f32 %v725, %v809
        %v811 = vpop.f32.mrb[0].mxu0
        %812 = vdwg.mxu0
        %813 = vst [vmem:[%s277] sm:$0xff] %v795
        %814 = vst [vmem:[%s277 + $0x8] sm:$0xff] %v800
        %815 = vst [vmem:[%s277 + $0x10] sm:$0xff] %v805
        %816 = vst [vmem:[%s277 + $0x18] sm:$0xff] %v810
        %s817 = sand.u32 %s141, 1
        %s818 = scalar_lea.sflag [#allocation4], %s817
        %s819 = sand.u32 %s141, 1
        %s820 = smul.addr %s819, 32
        %s821 = scalar_lea.vmem [#allocation8], %s820
        // Predicated region
        $region53: #{tpu_custom_call.1} parent=39 // pred_check
          %p822 = pneg %p151
        $region54: #{tpu_custom_call.1} parent=39 // pred_check_branch
          %824 = sbr.rel (%p822) target = $region56
        $region55: #{tpu_custom_call.1} parent=39 // pred_region
          %s825 = smul.u32 4, %s23
          %s826 = ssub.s32 5, %s825
          %p827 = scmp.lt.s32.totalorder %s826, 4
          %s828 = scalar_select %p827, %s826, 4
          %s829 = smul.u32 128, %s828
          %s831 = ssub.s32 512, %s829
          %832 = vsyncadd %s818, %s831
          %p833 = scmp.ne.s32.totalorder 0, %s829
          %s834 = smul.addr %s825, 128
          %s835 = scalar_lea.hbm %s5, %s834
          %s836 = smul.u32 8, %s828
          %s837 = sshll.u32 %s821, 4
          %s838 = int_to_ptr.vmem [resolvable:$true] %s837
          %s839 = sshll.u32 %s836, 4
          %843 = dma.vmem_to_hbm [thread:$0]  (%p833), %s838, %s839, %s835, %s818, 128, 128, 8
        $region56: #{tpu_custom_call.1} parent=39 // pred_fallthru
          _
      $region40: #{tpu_custom_call.1} parent=5 // pred_fallthru
        _
      %p844 = scmp.le.s32.totalorder 2, %s18
      // Predicated region
      $region57: #{tpu_custom_call.1} parent=5 // pred_check
        %p845 = pneg %p844
      $region58: #{tpu_custom_call.1} parent=5 // pred_check_branch
        %847 = sbr.rel (%p845) target = $region60
      $region59: #{tpu_custom_call.1} parent=5 // pred_region
        %s848 = ssub.s32 %s18, 2
        // Predicated region
        $region61: #{tpu_custom_call.1} parent=59 // pred_check
          %p849 = pneg %p157
        $region62: #{tpu_custom_call.1} parent=59 // pred_check_branch
          %851 = sbr.rel (%p849) target = $region64
        $region63: #{tpu_custom_call.1} parent=59 // pred_region
          %s852 = sand.u32 %s142, 1
          %s853 = scalar_lea.sflag [#allocation4], %s852
          %s854 = sand.u32 %s142, 1
          %s855 = smul.addr %s854, 32
          %s856 = scalar_lea.vmem [#allocation8], %s855
          %857 = dma.done %s853, 512
        $region64: #{tpu_custom_call.1} parent=59 // pred_fallthru
          _
      $region60: #{tpu_custom_call.1} parent=5 // pred_fallthru
        _
    $region6: #{tpu_custom_call.1} parent=1 // loop_footer
      %s22 = sadd.s32 1, %s18
    $region7: #{tpu_custom_call.1} parent=1 // loop_footer_branch
      %17 = sbr.rel target = $region3
    $region8: #{tpu_custom_call.1} parent=1 // loop_exit
      _
    %858 = vsyncpa [#allocation3], 1
    %s859 = scalar_lea.sflag [#allocation3], 1
    %860 = vsyncpa %s859, 1
    %861 = vsyncpa [#allocation6], 1
    %862 = vsyncpa [#allocation4], 1
    %s863 = scalar_lea.sflag [#allocation4], 1
    %864 = vsyncpa %s863, 1

</llo_original>
